<compile_context>
chip_gen: v6e
topology: v6e:2x2x1
jax: 0.10.0
libtpu: 0.0.40
codegen_flags: <defaults>
</compile_context>

<pallas_src>
import functools

import jax
import jax.numpy as jnp
from jax import lax
from jax.experimental import pallas as pl
from jax.experimental.pallas import tpu as pltpu


def _round_up(a, m):
    return ((a + m - 1) // m) * m


def _mymodel_kernel(x_ref, y_ref, w0_ref, scal_ref, w2_ref, b2_ref,
                    logits_ref, loss_ref, *, batch, hidden, tile_b):
    """One batch tile.

    x_ref:      (tile_b, H)      f32  VMEM
    y_ref:      (tile_b, 1)      i32  VMEM
    w0_ref:     (1, H)           f32  VMEM (resident; Linear(H,1).weight)
    scal_ref:   (1, 3)           f32  SMEM = [b0, w1, b1]
    w2_ref:     (1, H_pad)       f32  VMEM (resident; Linear(1,H).weight^T, 0-padded)
    b2_ref:     (1, H_pad)       f32  VMEM (resident; Linear(1,H).bias, 0-padded)
    logits_ref: (tile_b, H_pad)  f32  VMEM (lane-dense)
    loss_ref:   (1, 1)           f32  per-tile partial sum of (lse - picked)
    """
    x = x_ref[...]                                   # (tile_b, H)
    b0 = scal_ref[0, 0]
    w1 = scal_ref[0, 1]
    b1 = scal_ref[0, 2]

    # --- Linear(H, 1) + ReLU -> (tile_b, 1): VPU multiply + XLU row-reduce ---
    h1 = jnp.maximum(jnp.sum(x * w0_ref[...], axis=-1, keepdims=True) + b0, 0.0)
    # --- Linear(1, 1) + ReLU --------------------------------------------------
    h2 = jnp.maximum(h1 * w1 + b1, 0.0)              # (tile_b, 1)
    # --- Linear(1, H) + ReLU -> (tile_b, H_pad) lane-dense ---------------------
    logits = jnp.maximum(h2 * w2_ref[...] + b2_ref[...], 0.0)
    logits_ref[...] = logits

    # --- CrossEntropy partial: sum over valid rows of (lse - picked) ----------
    h_pad = logits.shape[-1]
    col = lax.broadcasted_iota(jnp.int32, (tile_b, h_pad), 1)
    col_ok = col < hidden                            # mask H padding columns
    z = jnp.where(col_ok, logits, -1e30)
    m = jnp.max(z, axis=-1, keepdims=True)           # >= 0 since logits = ReLU(.)
    lse = m + jnp.log(jnp.sum(jnp.exp(z - m), axis=-1, keepdims=True))
    picked = jnp.sum(jnp.where(col == y_ref[...], logits, 0.0),
                     axis=-1, keepdims=True)
    row = (pl.program_id(0) * tile_b
           + lax.broadcasted_iota(jnp.int32, (tile_b, 1), 0))
    row_ok = row < batch                             # mask batch padding rows
    loss_ref[...] = jnp.reshape(
        jnp.sum(jnp.where(row_ok, lse - picked, 0.0)), (1, 1))


def mymodel_forward(x, y, params):
    """x: (B, H) f32, y: (B,) integer class labels. Returns (logits, loss)."""
    B, H = x.shape
    w0, b0, w1, b1, w2, b2 = params

    # Lane-dense working width for logits (multiple of 128).
    H_pad = H if H % 128 == 0 else _round_up(H, 128)

    # Batch tile: <= 512 rows, and keep the logits tile <= ~4 MiB so the
    # double-buffered pipeline stays well inside v7x's 64 MiB VMEM.
    tile_b = max(8, min(512, (4 * 1024 * 1024) // (H_pad * 4)))
    tile_b = (tile_b // 8) * 8
    tile_b = min(tile_b, _round_up(B, 8))
    B_pad = _round_up(B, tile_b)
    num_tiles = B_pad // tile_b

    x_p = x.astype(jnp.float32)
    y_p = y.reshape(B, 1).astype(jnp.int32)
    if B_pad != B:
        x_p = jnp.pad(x_p, ((0, B_pad - B), (0, 0)))
        y_p = jnp.pad(y_p, ((0, B_pad - B), (0, 0)))

    w0_r = w0.reshape(1, H).astype(jnp.float32)      # Linear(H,1).weight (1,H)
    w2_r = w2.reshape(1, H).astype(jnp.float32)      # Linear(1,H).weight (H,1)->(1,H)
    b2_r = b2.reshape(1, H).astype(jnp.float32)      # Linear(1,H).bias
    if H_pad != H:
        w2_r = jnp.pad(w2_r, ((0, 0), (0, H_pad - H)))
        b2_r = jnp.pad(b2_r, ((0, 0), (0, H_pad - H)))
    scalars = jnp.stack([b0.reshape(()), w1.reshape(()), b1.reshape(())]
                        ).reshape(1, 3).astype(jnp.float32)

    kernel = functools.partial(_mymodel_kernel,
                               batch=B, hidden=H, tile_b=tile_b)

    logits, loss_parts = pl.pallas_call(
        kernel,
        grid=(num_tiles,),
        in_specs=[
            pl.BlockSpec((tile_b, H), lambda i: (i, 0)),         # x tile
            pl.BlockSpec((tile_b, 1), lambda i: (i, 0)),         # y tile
            pl.BlockSpec((1, H), lambda i: (0, 0)),              # w0 (resident)
            pl.BlockSpec(memory_space=pltpu.MemorySpace.SMEM),   # [b0, w1, b1]
            pl.BlockSpec((1, H_pad), lambda i: (0, 0)),          # w2 (resident)
            pl.BlockSpec((1, H_pad), lambda i: (0, 0)),          # b2 (resident)
        ],
        out_specs=(
            pl.BlockSpec((tile_b, H_pad), lambda i: (i, 0)),     # logits (lane-dense)
            pl.BlockSpec((1, 1), lambda i: (i, 0)),              # per-tile loss partial
        ),
        out_shape=(
            jax.ShapeDtypeStruct((B_pad, H_pad), jnp.float32),
            jax.ShapeDtypeStruct((num_tiles, 1), jnp.float32),
        ),
        compiler_params=pltpu.CompilerParams(
            dimension_semantics=("parallel",),
            vmem_limit_bytes=32 * 1024 * 1024,
        ),
    )(x_p, y_p, w0_r, scalars, w2_r, b2_r)

    if B_pad != B or H_pad != H:
        logits = logits[:B, :H]
    loss = jnp.sum(loss_parts) / B
    return logits, loss


def init_params(key, hidden_dim):
    """Deterministic PyTorch-style Linear init: U(-1/sqrt(fan_in), 1/sqrt(fan_in))."""
    ks = jax.random.split(key, 6)
    k0 = 1.0 / jnp.sqrt(hidden_dim)   # Linear(hidden_dim, 1)
    k1 = 1.0                          # Linear(1, 1)
    k2 = 1.0                          # Linear(1, hidden_dim)
    w0 = jax.random.uniform(ks[0], (1, hidden_dim), jnp.float32, -k0, k0)
    b0 = jax.random.uniform(ks[1], (1,), jnp.float32, -k0, k0)
    w1 = jax.random.uniform(ks[2], (1, 1), jnp.float32, -k1, k1)
    b1 = jax.random.uniform(ks[3], (1,), jnp.float32, -k1, k1)
    w2 = jax.random.uniform(ks[4], (hidden_dim, 1), jnp.float32, -k2, k2)
    b2 = jax.random.uniform(ks[5], (hidden_dim,), jnp.float32, -k2, k2)
    return (w0, b0, w1, b1, w2, b2)


def _reference_forward(x, y, params):
    """Pure-JAX reference mirroring the PyTorch module."""
    w0, b0, w1, b1, w2, b2 = params
    h = jnp.maximum(x @ w0.T + b0, 0.0)           # (B,1)
    h = jnp.maximum(h @ w1.T + b1, 0.0)           # (B,1)
    logits = jnp.maximum(h @ w2.T + b2, 0.0)      # (B,H)
    lse = jax.scipy.special.logsumexp(logits, axis=-1)
    picked = jnp.take_along_axis(logits, y[:, None], axis=-1)[:, 0]
    loss = jnp.mean(lse - picked)
    return logits, loss


if __name__ == "__main__":
    B, H = 8, 32
    key = jax.random.PRNGKey(0)
    kx, ky, kp = jax.random.split(key, 3)
    x = jax.random.normal(kx, (B, H), jnp.float32)
    y = jax.random.randint(ky, (B,), 0, H, jnp.int32)
    params = init_params(kp, H)

    logits, loss = mymodel_forward(x, y, params)
    jax.block_until_ready((logits, loss))

    ref_logits, ref_loss = _reference_forward(x, y, params)
    assert jnp.allclose(logits, ref_logits, atol=1e-5, rtol=1e-5)
    assert jnp.allclose(loss, ref_loss, atol=1e-5, rtol=1e-5)

    print("KERNEL_OK")
</pallas_src>

<mosaic_0001>
module attributes {stable_mosaic.version = 11 : i64} {
  func.func @_mymodel_kernel(%arg0: i32, %arg1: memref<8x32xf32, #tpu.memory_space<vmem>>, %arg2: memref<8x1xi32, #tpu.memory_space<vmem>>, %arg3: memref<1x32xf32, #tpu.memory_space<vmem>>, %arg4: memref<1x3xf32, #tpu.memory_space<smem>>, %arg5: memref<1x128xf32, #tpu.memory_space<vmem>>, %arg6: memref<1x128xf32, #tpu.memory_space<vmem>>, %arg7: memref<8x128xf32, #tpu.memory_space<vmem>>, %arg8: memref<1x1xf32, #tpu.memory_space<vmem>>) attributes {dimension_semantics = [#tpu.dimension_semantics<parallel>], iteration_bounds = array<i64: 1>, scalar_prefetch = 0 : i64, scratch_operands = 0 : i64, tpu.core_type = #tpu.core_type<tc>, window_params = [{transform_indices = @transform_0, window_bounds = array<i64: 8, 32>}, {transform_indices = @transform_1, window_bounds = array<i64: 8, 1>}, {pipeline_mode = #tpu.pipeline_mode<synchronous>, transform_indices = @transform_2, window_bounds = array<i64: 1, 32>}, {transform_indices = @transform_3, window_bounds = array<i64: 1, 3>}, {pipeline_mode = #tpu.pipeline_mode<synchronous>, transform_indices = @transform_4, window_bounds = array<i64: 1, 128>}, {pipeline_mode = #tpu.pipeline_mode<synchronous>, transform_indices = @transform_5, window_bounds = array<i64: 1, 128>}, {transform_indices = @transform_6, window_bounds = array<i64: 8, 128>}, {transform_indices = @transform_7, window_bounds = array<i64: 1, 1>}]} {
    %c0 = arith.constant 0 : index
    %c0_0 = arith.constant 0 : index
    %0 = vector.load %arg1[%c0, %c0_0] : memref<8x32xf32, #tpu.memory_space<vmem>>, vector<8x32xf32>
    %c0_1 = arith.constant 0 : index
    %c0_2 = arith.constant 0 : index
    %1 = memref.load %arg4[%c0_1, %c0_2] : memref<1x3xf32, #tpu.memory_space<smem>>
    %c0_3 = arith.constant 0 : index
    %c1 = arith.constant 1 : index
    %2 = memref.load %arg4[%c0_3, %c1] : memref<1x3xf32, #tpu.memory_space<smem>>
    %c0_4 = arith.constant 0 : index
    %c2 = arith.constant 2 : index
    %3 = memref.load %arg4[%c0_4, %c2] : memref<1x3xf32, #tpu.memory_space<smem>>
    %c0_5 = arith.constant 0 : index
    %c0_6 = arith.constant 0 : index
    %4 = vector.load %arg3[%c0_5, %c0_6] : memref<1x32xf32, #tpu.memory_space<vmem>>, vector<1x32xf32>
    %5 = vector.broadcast %4 : vector<1x32xf32> to vector<8x32xf32>
    %6 = arith.mulf %0, %5 : vector<8x32xf32>
    %cst = arith.constant dense<0.000000e+00> : vector<8xf32>
    %7 = vector.multi_reduction <add>, %6, %cst [1] : vector<8x32xf32> to vector<8xf32>
    %8 = vector.shape_cast %7 : vector<8xf32> to vector<8x1xf32>
    %9 = vector.broadcast %1 : f32 to vector<8x1xf32>
    %10 = arith.addf %8, %9 : vector<8x1xf32>
    %cst_7 = arith.constant 0.000000e+00 : f32
    %11 = vector.broadcast %cst_7 : f32 to vector<8x1xf32>
    %12 = arith.maximumf %10, %11 : vector<8x1xf32>
    %13 = vector.broadcast %2 : f32 to vector<8x1xf32>
    %14 = arith.mulf %12, %13 : vector<8x1xf32>
    %15 = vector.broadcast %3 : f32 to vector<8x1xf32>
    %16 = arith.addf %14, %15 : vector<8x1xf32>
    %cst_8 = arith.constant 0.000000e+00 : f32
    %17 = vector.broadcast %cst_8 : f32 to vector<8x1xf32>
    %18 = arith.maximumf %16, %17 : vector<8x1xf32>
    %c0_9 = arith.constant 0 : index
    %c0_10 = arith.constant 0 : index
    %19 = vector.load %arg5[%c0_9, %c0_10] : memref<1x128xf32, #tpu.memory_space<vmem>>, vector<1x128xf32>
    %20 = vector.broadcast %18 : vector<8x1xf32> to vector<8x128xf32>
    %21 = vector.broadcast %19 : vector<1x128xf32> to vector<8x128xf32>
    %22 = arith.mulf %20, %21 : vector<8x128xf32>
    %c0_11 = arith.constant 0 : index
    %c0_12 = arith.constant 0 : index
    %23 = vector.load %arg6[%c0_11, %c0_12] : memref<1x128xf32, #tpu.memory_space<vmem>>, vector<1x128xf32>
    %24 = vector.broadcast %23 : vector<1x128xf32> to vector<8x128xf32>
    %25 = arith.addf %22, %24 : vector<8x128xf32>
    %cst_13 = arith.constant 0.000000e+00 : f32
    %26 = vector.broadcast %cst_13 : f32 to vector<8x128xf32>
    %27 = arith.maximumf %25, %26 : vector<8x128xf32>
    %c0_14 = arith.constant 0 : index
    %c0_15 = arith.constant 0 : index
    %28 = vector.load %arg7[%c0_14, %c0_15] : memref<8x128xf32, #tpu.memory_space<vmem>>, vector<8x128xf32>
    tpu.vector_store %arg7[%c0_14, %c0_15], %27 {strides = array<i32>} : memref<8x128xf32, #tpu.memory_space<vmem>>, vector<8x128xf32>,
    %29 = tpu.iota {dimensions = array<i32: 1>} : vector<8x128xi32>
    %c32_i32 = arith.constant 32 : i32
    %30 = vector.broadcast %c32_i32 : i32 to vector<8x128xi32>
    %31 = arith.cmpi slt, %29, %30 : vector<8x128xi32>
    %cst_16 = arith.constant -1.000000e+30 : f32
    %32 = vector.broadcast %cst_16 : f32 to vector<8x128xf32>
    %33 = arith.select %31, %27, %32 : vector<8x128xi1>, vector<8x128xf32>
    %cst_17 = arith.constant dense<0xFF800000> : vector<8xf32>
    %34 = vector.multi_reduction <maximumf>, %33, %cst_17 [1] : vector<8x128xf32> to vector<8xf32>
    %35 = vector.shape_cast %34 : vector<8xf32> to vector<8x1xf32>
    %36 = vector.broadcast %35 : vector<8x1xf32> to vector<8x128xf32>
    %37 = arith.subf %33, %36 : vector<8x128xf32>
    %38 = math.exp %37 : vector<8x128xf32>
    %cst_18 = arith.constant dense<0.000000e+00> : vector<8xf32>
    %39 = vector.multi_reduction <add>, %38, %cst_18 [1] : vector<8x128xf32> to vector<8xf32>
    %40 = vector.shape_cast %39 : vector<8xf32> to vector<8x1xf32>
    %41 = math.log %40 : vector<8x1xf32>
    %42 = arith.addf %35, %41 : vector<8x1xf32>
    %c0_19 = arith.constant 0 : index
    %c0_20 = arith.constant 0 : index
    %43 = vector.load %arg2[%c0_19, %c0_20] : memref<8x1xi32, #tpu.memory_space<vmem>>, vector<8x1xi32>
    %44 = vector.broadcast %43 : vector<8x1xi32> to vector<8x128xi32>
    %45 = arith.cmpi eq, %29, %44 : vector<8x128xi32>
    %cst_21 = arith.constant 0.000000e+00 : f32
    %46 = vector.broadcast %cst_21 : f32 to vector<8x128xf32>
    %47 = arith.select %45, %27, %46 : vector<8x128xi1>, vector<8x128xf32>
    %cst_22 = arith.constant dense<0.000000e+00> : vector<8xf32>
    %48 = vector.multi_reduction <add>, %47, %cst_22 [1] : vector<8x128xf32> to vector<8xf32>
    %49 = vector.shape_cast %48 : vector<8xf32> to vector<8x1xf32>
    %c8_i32 = arith.constant 8 : i32
    %50 = arith.muli %arg0, %c8_i32 : i32
    %51 = tpu.iota {dimensions = array<i32: 0>} : vector<8x1xi32>
    %52 = vector.broadcast %50 : i32 to vector<8x1xi32>
    %53 = arith.addi %52, %51 : vector<8x1xi32>
    %c8_i32_23 = arith.constant 8 : i32
    %54 = vector.broadcast %c8_i32_23 : i32 to vector<8x1xi32>
    %55 = arith.cmpi slt, %53, %54 : vector<8x1xi32>
    %56 = arith.subf %42, %49 : vector<8x1xf32>
    %cst_24 = arith.constant 0.000000e+00 : f32
    %57 = vector.broadcast %cst_24 : f32 to vector<8x1xf32>
    %58 = arith.select %55, %56, %57 : vector<8x1xi1>, vector<8x1xf32>
    %59 = vector.shape_cast %58 : vector<8x1xf32> to vector<1x8x1xf32>
    %cst_25 = arith.constant dense<0.000000e+00> : vector<1xf32>
    %60 = vector.multi_reduction <add>, %59, %cst_25 [1, 2] : vector<1x8x1xf32> to vector<1xf32>
    %61 = vector.shape_cast %60 : vector<1xf32> to vector<1x1x1xf32>
    %62 = vector.extract %61[0, 0, 0] : f32 from vector<1x1x1xf32>
    %63 = vector.broadcast %62 : f32 to vector<1x1xf32>
    %c0_26 = arith.constant 0 : index
    %c0_27 = arith.constant 0 : index
    %64 = vector.load %arg8[%c0_26, %c0_27] : memref<1x1xf32, #tpu.memory_space<vmem>>, vector<1x1xf32>
    tpu.vector_store %arg8[%c0_26, %c0_27], %63 {strides = array<i32>} : memref<1x1xf32, #tpu.memory_space<vmem>>, vector<1x1xf32>,
    return
  }
  func.func @transform_0(%arg0: i32) -> (i32, i32) {
    %c0_i32 = arith.constant 0 : i32
    %c0_i32_0 = arith.constant 0 : i32
    return %arg0, %c0_i32 : i32, i32
  }
  func.func @transform_1(%arg0: i32) -> (i32, i32) {
    %c0_i32 = arith.constant 0 : i32
    %c0_i32_0 = arith.constant 0 : i32
    return %arg0, %c0_i32 : i32, i32
  }
  func.func @transform_2(%arg0: i32) -> (i32, i32) {
    %c0_i32 = arith.constant 0 : i32
    %c0_i32_0 = arith.constant 0 : i32
    %c0_i32_1 = arith.constant 0 : i32
    return %c0_i32, %c0_i32_0 : i32, i32
  }
  func.func @transform_3(%arg0: i32) -> (i32, i32) {
    %c0_i32 = arith.constant 0 : i32
    %c0_i32_0 = arith.constant 0 : i32
    %c0_i32_1 = arith.constant 0 : i32
    return %c0_i32, %c0_i32_0 : i32, i32
  }
  func.func @transform_4(%arg0: i32) -> (i32, i32) {
    %c0_i32 = arith.constant 0 : i32
    %c0_i32_0 = arith.constant 0 : i32
    %c0_i32_1 = arith.constant 0 : i32
    return %c0_i32, %c0_i32_0 : i32, i32
  }
  func.func @transform_5(%arg0: i32) -> (i32, i32) {
    %c0_i32 = arith.constant 0 : i32
    %c0_i32_0 = arith.constant 0 : i32
    %c0_i32_1 = arith.constant 0 : i32
    return %c0_i32, %c0_i32_0 : i32, i32
  }
  func.func @transform_6(%arg0: i32) -> (i32, i32) {
    %c0_i32 = arith.constant 0 : i32
    %c0_i32_0 = arith.constant 0 : i32
    return %arg0, %c0_i32 : i32, i32
  }
  func.func @transform_7(%arg0: i32) -> (i32, i32) {
    %c0_i32 = arith.constant 0 : i32
    %c0_i32_0 = arith.constant 0 : i32
    return %arg0, %c0_i32 : i32, i32
  }
}

</mosaic_0001>

<llo_original>
// kernel: tpu_custom_call.1
$region0: #{tpu_custom_call.1}
  #allocation0 [shape = 'u32[]', space=smem, size = 0x4, offset = 0x4, fixed_abs, tag = 'smem constant byte address 0x4 - core index']
  #allocation1 [shape = 'u32[144,128]{1,0:T(1,128)}', space=vmem, size = 0x12000, scoped, tag = 'internal scratch']
  %s0 = inlined_call_operand.vmem [shape: f32[8,32], index: 0, kind: input, shape index: {}]
  %s1 = inlined_call_operand.vmem [shape: s32[8,1], index: 1, kind: input, shape index: {}]
  %s2 = inlined_call_operand.vmem [shape: f32[1,32], index: 2, kind: input, shape index: {}]
  %s3 = inlined_call_operand.vmem [shape: f32[1,3], index: 3, kind: input, shape index: {}]
  %s4 = inlined_call_operand.vmem [shape: f32[1,128], index: 4, kind: input, shape index: {}]
  %s5 = inlined_call_operand.vmem [shape: f32[1,128], index: 5, kind: input, shape index: {}]
  %s6 = inlined_call_operand.hbm [shape: f32[8,128], index: 6, kind: output, shape index: {0}]
  %s7 = inlined_call_operand.hbm [shape: f32[1,1], index: 7, kind: output, shape index: {1}]
  %8 = xla_tuple %s6, %s7
  %s9 = sld [smem:[#allocation0]]
  $region46: #{tpu_custom_call.1} parent=0
    _
  %s11 = ssub.s32 1, %s9
  %s12 = scalar_select 0, %s11, %s9
  $region1: #{tpu_custom_call.1} parent=0
    #allocation2 [shape = 'u8[512]{0}', space=smem, size = 0x200, scoped, tag = 'input window, operand 3, single buffered']
    #allocation3 [shape = 's32[1]{0}', space=sflag, size = 0x4, scoped, tag = 'scoped memory for tpu_custom_call.1']
    #allocation4 [shape = 's32[1]{0}', space=sflag, size = 0x4, scoped, tag = 'scoped memory for tpu_custom_call.1']
    #allocation5 [shape = 'u8[4096]{0}', space=vmem, size = 0x1000, scoped, tag = 'output window, operand 0, single buffered']
    #allocation6 [shape = 'u8[512]{0}', space=vmem, size = 0x400, scoped, tag = 'output window, operand 1, single buffered']
    #allocation7 [shape = 's32[1]{0}', space=sflag, size = 0x4, scoped, tag = 'scoped memory for tpu_custom_call.1']
    %13 = vsyncpa [#allocation4], 0
    %14 = vsyncpa [#allocation3], 0
    %15 = vsyncpa [#allocation7], 0
    // Predicated region
    $region2: #{tpu_custom_call.1} parent=1 // pred_check
      _
    $region3: #{tpu_custom_call.1} parent=1 // pred_check_branch
      %17 = sbr.rel (0) target = $region5
    $region4: #{tpu_custom_call.1} parent=1 // pred_region
      _
    $region5: #{tpu_custom_call.1} parent=1 // pred_fallthru
      _
    // Predicated region
    $region6: #{tpu_custom_call.1} parent=1 // pred_check
      _
    $region7: #{tpu_custom_call.1} parent=1 // pred_check_branch
      %19 = sbr.rel (0) target = $region9
    $region8: #{tpu_custom_call.1} parent=1 // pred_region
      _
    $region9: #{tpu_custom_call.1} parent=1 // pred_fallthru
      _
    // Predicated region
    $region10: #{tpu_custom_call.1} parent=1 // pred_check
      _
    $region11: #{tpu_custom_call.1} parent=1 // pred_check_branch
      %21 = sbr.rel (0) target = $region13
    $region12: #{tpu_custom_call.1} parent=1 // pred_region
      _
    $region13: #{tpu_custom_call.1} parent=1 // pred_fallthru
      _
    // Predicated region
    $region14: #{tpu_custom_call.1} parent=1 // pred_check
      _
    $region15: #{tpu_custom_call.1} parent=1 // pred_check_branch
      %23 = sbr.rel (0) target = $region17
    $region16: #{tpu_custom_call.1} parent=1 // pred_region
      %s25 = ssub.s32 16, 16
      %26 = vsyncadd [#allocation4], %s25
      %s28 = sshll.u32 %s3, 4
      %s29 = int_to_ptr.vmem [resolvable:$true] %s28
      %31 = dma.vmem_to_smem %s29, 16, [#allocation2], [#allocation4]
    $region17: #{tpu_custom_call.1} parent=1 // pred_fallthru
      _
    // Predicated region
    $region18: #{tpu_custom_call.1} parent=1 // pred_check
      _
    $region19: #{tpu_custom_call.1} parent=1 // pred_check_branch
      %33 = sbr.rel (0) target = $region21
    $region20: #{tpu_custom_call.1} parent=1 // pred_region
      _
    $region21: #{tpu_custom_call.1} parent=1 // pred_fallthru
      _
    // Predicated region
    $region22: #{tpu_custom_call.1} parent=1 // pred_check
      _
    $region23: #{tpu_custom_call.1} parent=1 // pred_check_branch
      %35 = sbr.rel (0) target = $region25
    $region24: #{tpu_custom_call.1} parent=1 // pred_region
      _
    $region25: #{tpu_custom_call.1} parent=1 // pred_fallthru
      _
    // Predicated region
    $region26: #{tpu_custom_call.1} parent=1 // pred_check
      _
    $region27: #{tpu_custom_call.1} parent=1 // pred_check_branch
      %37 = sbr.rel (0) target = $region29
    $region28: #{tpu_custom_call.1} parent=1 // pred_region
      %38 = dma.done [#allocation4], 16
    $region29: #{tpu_custom_call.1} parent=1 // pred_fallthru
      _
    %39 = sfence
    %v40 = vld [vmem:[%s0] sm:$0xff]
    %s41 = sld [smem:[#allocation2]]
    %s42 = sld [smem:[#allocation2 + $0x1]]
    %s43 = sld [smem:[#allocation2 + $0x2]]
    %v44 = vld [vmem:[%s2] sm:$0x1]
    %v46 = vlaneseq
    %v47 = vshrl.u32 %v46, 7
    %v48 = vsub.s32 0, %v47
    %v49 = vrot.slane %v44, %v48
    %v51 = vmul.f32 %v40, %v49
    %vm52 = vcmask 261120
    %v53 = vsel %vm52, %v51, 0.0
    %54 = vadd.xlane.f32.xlu0 %v53
    %v55 = vpop.xlane.xlu0 %54
    %v56 = vstv %s41
    %v57 = vadd.f32 %v55, %v56
    %v58 = vmax.f32 %v57, 0.0
    %v59 = vstv %s42
    %v60 = vmul.f32 %v58, %v59
    %v61 = vstv %s43
    %v62 = vadd.f32 %v60, %v61
    %v63 = vmax.f32 %v62, 0.0
    %v64 = vld [vmem:[%s4] sm:$0x1]
    %v66 = vlaneseq
    %v67 = vshrl.u32 %v66, 7
    %v68 = vsub.s32 0, %v67
    %v69 = vrot.slane %v64, %v68
    %v71 = vmul.f32 %v63, %v69
    %v72 = vld [vmem:[%s5] sm:$0x1]
    %v74 = vlaneseq
    %v75 = vshrl.u32 %v74, 7
    %v76 = vsub.s32 0, %v75
    %v77 = vrot.slane %v72, %v76
    %v79 = vadd.f32 %v71, %v77
    %v80 = vmax.f32 %v79, 0.0
    %81 = vst [vmem:[#allocation5] sm:$0xff] %v80
    %v82 = vlaneseq
    %v83 = vand.u32 %v82, 127
    %vm84 = vcmp.lt.s32.totalorder %v83, 32
    %v85 = vsel %vm84, %v80, -1e+30
    %86 = vmax.xlane.f32.xlu0 %v85
    %v87 = vpop.xlane.xlu0 %86
    %v88 = vsub.f32 %v85, %v87
    %v89 = vmul.f32 %v88, 1.442695
    %v90 = vpow.pop %v89
    %91 = vadd.xlane.f32.xlu0 %v90
    %v92 = vpop.xlane.xlu0 %91
    %v93 = vlog2.pop %v92
    %v94 = vmul.f32 %v93, 0.6931472
    %v95 = vadd.f32 %v87, %v94
    %v96 = vld [vmem:[%s1] sm:$0xff]
    %97 = vset.pattern.permute.xlu0 0
    %98 = vperm.xlu0 %97, %v96
    %v99 = vpop.permute.xlu0 %98
    %vm100 = vcmp.eq.s32.totalorder %v83, %v99
    %v101 = vsel %vm100, %v80, 0.0
    %102 = vadd.xlane.f32.xlu0 %v101
    %v103 = vpop.xlane.xlu0 %102
    %s104 = smul.u32 0, 8
    %v105 = vlaneseq
    %v106 = vshrl.u32 %v105, 7
    %v107 = vstv %s104
    %v108 = vadd.s32 %v107, %v106
    %vm109 = vcmp.lt.s32.totalorder %v108, 8
    %v110 = vsub.f32 %v95, %v103
    %v111 = vsel %vm109, %v110, 0.0
    %vm112 = vcmask 7168
    %v113 = vsel %vm112, %v111, 0.0
    %114 = vadd.xlane.f32.xlu0 %v113
    %v115 = vpop.xlane.xlu0 %114
    %v116 = vrot.slane %v115, 4
    %v117 = vadd.f32 %v115, %v116
    %v118 = vrot.slane %v117, 2
    %v119 = vadd.f32 %v117, %v118
    %v120 = vrot.slane %v119, 1
    %v121 = vadd.f32 %v119, %v120
    %s122 = vtos %v121
    %v123 = vstv %s122
    %vm124 = vcmask 0
    %125 = vst.msk [vmem:[#allocation6] sm:$0x1] %vm124, %v123
    // Predicated region
    $region30: #{tpu_custom_call.1} parent=1 // pred_check
      _
    $region31: #{tpu_custom_call.1} parent=1 // pred_check_branch
      %127 = sbr.rel (0) target = $region33
    $region32: #{tpu_custom_call.1} parent=1 // pred_region
      %s129 = ssub.s32 128, 128
      %130 = vsyncadd [#allocation3], %s129
      %s132 = sshll.u32 [#allocation5], 4
      %s133 = int_to_ptr.vmem [resolvable:$true] %s132
      %135 = dma.vmem_to_hbm [thread:$0]  %s133, 128, %s6, [#allocation3]
    $region33: #{tpu_custom_call.1} parent=1 // pred_fallthru
      _
    // Predicated region
    $region34: #{tpu_custom_call.1} parent=1 // pred_check
      _
    $region35: #{tpu_custom_call.1} parent=1 // pred_check_branch
      %137 = sbr.rel (0) target = $region37
    $region36: #{tpu_custom_call.1} parent=1 // pred_region
      %s139 = ssub.s32 16, 16
      %140 = vsyncadd [#allocation7], %s139
      %s142 = sshll.u32 [#allocation6], 4
      %s143 = int_to_ptr.vmem [resolvable:$true] %s142
      %145 = dma.vmem_to_hbm [thread:$0]  %s143, 16, %s7, [#allocation7]
    $region37: #{tpu_custom_call.1} parent=1 // pred_fallthru
      _
    // Predicated region
    $region38: #{tpu_custom_call.1} parent=1 // pred_check
      _
    $region39: #{tpu_custom_call.1} parent=1 // pred_check_branch
      %147 = sbr.rel (0) target = $region41
    $region40: #{tpu_custom_call.1} parent=1 // pred_region
      %148 = dma.done [#allocation3], 128
    $region41: #{tpu_custom_call.1} parent=1 // pred_fallthru
      _
    // Predicated region
    $region42: #{tpu_custom_call.1} parent=1 // pred_check
      _
    $region43: #{tpu_custom_call.1} parent=1 // pred_check_branch
      %150 = sbr.rel (0) target = $region45
    $region44: #{tpu_custom_call.1} parent=1 // pred_region
      %151 = dma.done [#allocation7], 16
    $region45: #{tpu_custom_call.1} parent=1 // pred_fallthru
      _
    %152 = vsyncpa [#allocation3], 1
    %153 = vsyncpa [#allocation7], 1
    %154 = vsyncpa [#allocation4], 1

</llo_original>
